<compile_context>
chip_gen: v6e
topology: v6e:2x2x1
jax: 0.10.0
libtpu: 0.0.40
codegen_flags: <defaults>
</compile_context>

<pallas_src>
import functools

import jax
import jax.numpy as jnp
from jax.experimental import pallas as pl
from jax.experimental.pallas import tpu as pltpu


def _linear_zeros_kernel(x_ref, wt_ref, b_ref, l_ref, o_ref, acc_ref, *,
                         logscale_factor):
    k = pl.program_id(2)

    @pl.when(k == 0)
    def _():
        acc_ref[...] = jnp.zeros_like(acc_ref)

    # (tm, tk) @ (tk, tn) on the MXU, bf16 operands, f32 accumulation.
    acc_ref[...] += jnp.dot(x_ref[...], wt_ref[...],
                            preferred_element_type=jnp.float32)

    @pl.when(k == pl.num_programs(2) - 1)
    def _():
        # Bias + exp(logs * logscale_factor) scale, once per output tile (f32, EUP).
        scale = jnp.exp(l_ref[...] * logscale_factor)          # (1, tn)
        o_ref[...] = (acc_ref[...] + b_ref[...]) * scale


def _round_up(a, b):
    return -(-a // b) * b


def linear_zeros_forward(x, weight, bias, logs, *, logscale_factor=3,
                         tm=128, tn=128, tk=512):
    """LinearZeros forward: (x @ weight.T + bias) * exp(logs * logscale_factor).

    x: [..., in_features] float32; weight: [out_features, in_features] (PyTorch layout).
    """
    out_features, in_features = weight.shape
    lead = x.shape[:-1]
    x2 = x.reshape(-1, in_features)
    M, K = x2.shape
    N = out_features

    # Tile sizes: 16-row granularity for bf16 sublane packing, 128-lane granularity.
    tm = max(16, min(tm, _round_up(M, 16)))
    tn = max(128, min(tn, _round_up(N, 128)))
    tk = max(128, min(tk, _round_up(K, 128)))
    Mp, Kp, Np = _round_up(M, tm), _round_up(K, tk), _round_up(N, tn)

    # Zero-pad to tile multiples (zeros are inert in the matmul; padded output columns
    # are sliced away below).  Matmul operands in bf16, parameters kept f32.
    xp = jnp.zeros((Mp, Kp), jnp.bfloat16).at[:M, :K].set(x2.astype(jnp.bfloat16))
    wtp = jnp.zeros((Kp, Np), jnp.bfloat16).at[:K, :N].set(
        weight.T.astype(jnp.bfloat16))
    bp = jnp.zeros((1, Np), jnp.float32).at[0, :N].set(bias.astype(jnp.float32))
    lp = jnp.zeros((1, Np), jnp.float32).at[0, :N].set(logs.astype(jnp.float32))

    grid = (Mp // tm, Np // tn, Kp // tk)
    kernel = functools.partial(_linear_zeros_kernel,
                               logscale_factor=float(logscale_factor))

    out = pl.pallas_call(
        kernel,
        out_shape=jax.ShapeDtypeStruct((Mp, Np), jnp.float32),
        grid_spec=pltpu.PrefetchScalarGridSpec(
            num_scalar_prefetch=0,
            grid=grid,
            in_specs=[
                pl.BlockSpec((tm, tk), lambda i, j, k: (i, k)),   # x tile
                pl.BlockSpec((tk, tn), lambda i, j, k: (k, j)),   # W^T tile
                pl.BlockSpec((1, tn), lambda i, j, k: (0, j)),    # bias
                pl.BlockSpec((1, tn), lambda i, j, k: (0, j)),    # logs
            ],
            out_specs=pl.BlockSpec((tm, tn), lambda i, j, k: (i, j)),
            scratch_shapes=[pltpu.VMEM((tm, tn), jnp.float32)],
        ),
        compiler_params=pltpu.CompilerParams(
            dimension_semantics=("parallel", "parallel", "arbitrary"),
            vmem_limit_bytes=32 * 1024 * 1024,
        ),
        cost_estimate=pl.CostEstimate(
            flops=2 * Mp * Np * Kp,
            transcendentals=Np * (Mp // tm),
            bytes_accessed=(xp.size * 2 * (Np // tn)
                            + wtp.size * 2 * (Mp // tm)
                            + Mp * Np * 4 + 2 * Np * 4),
        ),
    )(xp, wtp, bp, lp)

    return out[:M, :N].reshape(lead + (N,))


def _reference(x, weight, bias, logs, logscale_factor=3):
    """Pure-JAX reference of the same forward pass (for correctness check)."""
    y = jnp.einsum("...k,nk->...n", x, weight,
                   precision=jax.lax.Precision.HIGHEST) + bias
    return y * jnp.exp(logs * logscale_factor)


if __name__ == "__main__":
    B, S, IN, OUT = 2, 16, 256, 48
    key = jax.random.PRNGKey(0)
    kx, kw, kb, kl = jax.random.split(key, 4)

    x = jax.random.normal(kx, (B, S, IN), jnp.float32)
    # NOTE: LinearZeros zero-initialises weight/bias/logs (training-time init); small
    # deterministic random values are used so the matmul / scale path is exercised.
    weight = 0.05 * jax.random.normal(kw, (OUT, IN), jnp.float32)
    bias = 0.05 * jax.random.normal(kb, (OUT,), jnp.float32)
    logs = 0.05 * jax.random.normal(kl, (OUT,), jnp.float32)

    # Small tiles so the test exercises a multi-step grid: (M/16, N/128, K/128)=(2,1,2).
    y = linear_zeros_forward(x, weight, bias, logs, logscale_factor=3,
                             tm=16, tn=128, tk=128)
    jax.block_until_ready(y)

    ref = _reference(x, weight, bias, logs, logscale_factor=3)
    assert y.shape == (B, S, OUT)
    assert jnp.allclose(y, ref, rtol=2e-2, atol=2e-2), (y, ref)
    print("KERNEL_OK")
</pallas_src>

<mosaic_0001>
module attributes {stable_mosaic.version = 11 : i64} {
  func.func @_linear_zeros_kernel(%arg0: i32, %arg1: i32, %arg2: i32, %arg3: memref<16x128xbf16, #tpu.memory_space<vmem>>, %arg4: memref<128x128xbf16, #tpu.memory_space<vmem>>, %arg5: memref<1x128xf32, #tpu.memory_space<vmem>>, %arg6: memref<1x128xf32, #tpu.memory_space<vmem>>, %arg7: memref<16x128xf32, #tpu.memory_space<vmem>>, %arg8: memref<16x128xf32, #tpu.memory_space<vmem>>) attributes {dimension_semantics = [#tpu.dimension_semantics<parallel>, #tpu.dimension_semantics<parallel>, #tpu.dimension_semantics<arbitrary>], iteration_bounds = array<i64: 2, 1, 2>, scalar_prefetch = 0 : i64, scratch_operands = 1 : i64, tpu.core_type = #tpu.core_type<tc>, window_params = [{transform_indices = @transform_0, window_bounds = array<i64: 16, 128>}, {transform_indices = @transform_1, window_bounds = array<i64: 128, 128>}, {transform_indices = @transform_2, window_bounds = array<i64: 1, 128>}, {transform_indices = @transform_3, window_bounds = array<i64: 1, 128>}, {transform_indices = @transform_4, window_bounds = array<i64: 16, 128>}]} {
    %c0_i32 = arith.constant 0 : i32
    %0 = arith.cmpi eq, %arg2, %c0_i32 : i32
    %1 = arith.extui %0 : i1 to i32
    %c0_i32_0 = arith.constant 0 : i32
    %2 = arith.cmpi ne, %1, %c0_i32_0 : i32
    scf.if %2 {
      %cst_9 = arith.constant 0.000000e+00 : f32
      %12 = vector.broadcast %cst_9 : f32 to vector<16x128xf32>
      %c0_10 = arith.constant 0 : index
      %c0_11 = arith.constant 0 : index
      %13 = vector.load %arg8[%c0_10, %c0_11] : memref<16x128xf32, #tpu.memory_space<vmem>>, vector<16x128xf32>
      tpu.vector_store %arg8[%c0_10, %c0_11], %12 {strides = array<i32>} : memref<16x128xf32, #tpu.memory_space<vmem>>, vector<16x128xf32>,
    } else {
    }
    %c0 = arith.constant 0 : index
    %c0_1 = arith.constant 0 : index
    %3 = vector.load %arg8[%c0, %c0_1] : memref<16x128xf32, #tpu.memory_space<vmem>>, vector<16x128xf32>
    %c0_2 = arith.constant 0 : index
    %c0_3 = arith.constant 0 : index
    %4 = vector.load %arg3[%c0_2, %c0_3] : memref<16x128xbf16, #tpu.memory_space<vmem>>, vector<16x128xbf16>
    %c0_4 = arith.constant 0 : index
    %c0_5 = arith.constant 0 : index
    %5 = vector.load %arg4[%c0_4, %c0_5] : memref<128x128xbf16, #tpu.memory_space<vmem>>, vector<128x128xbf16>
    %cst = arith.constant dense<0.000000e+00> : vector<16x128xf32>
    %6 = tpu.matmul %4, %5, %cst {dimension_numbers = #tpu.dot_dimension_numbers<[1], [0], [0], [1], [0, 0, 1, 1], [], []>} : vector<16x128xbf16>, vector<128x128xbf16>, vector<16x128xf32> -> vector<16x128xf32>
    %7 = arith.addf %3, %6 : vector<16x128xf32>
    %c0_6 = arith.constant 0 : index
    %c0_7 = arith.constant 0 : index
    %8 = vector.load %arg8[%c0_6, %c0_7] : memref<16x128xf32, #tpu.memory_space<vmem>>, vector<16x128xf32>
    tpu.vector_store %arg8[%c0_6, %c0_7], %7 {strides = array<i32>} : memref<16x128xf32, #tpu.memory_space<vmem>>, vector<16x128xf32>,
    %c1_i32 = arith.constant 1 : i32
    %9 = arith.cmpi eq, %arg2, %c1_i32 : i32
    %10 = arith.extui %9 : i1 to i32
    %c0_i32_8 = arith.constant 0 : i32
    %11 = arith.cmpi ne, %10, %c0_i32_8 : i32
    scf.if %11 {
      %c0_9 = arith.constant 0 : index
      %c0_10 = arith.constant 0 : index
      %12 = vector.load %arg6[%c0_9, %c0_10] : memref<1x128xf32, #tpu.memory_space<vmem>>, vector<1x128xf32>
      %cst_11 = arith.constant 3.000000e+00 : f32
      %13 = vector.broadcast %cst_11 : f32 to vector<1x128xf32>
      %14 = arith.mulf %12, %13 : vector<1x128xf32>
      %15 = math.exp %14 : vector<1x128xf32>
      %c0_12 = arith.constant 0 : index
      %c0_13 = arith.constant 0 : index
      %16 = vector.load %arg8[%c0_12, %c0_13] : memref<16x128xf32, #tpu.memory_space<vmem>>, vector<16x128xf32>
      %c0_14 = arith.constant 0 : index
      %c0_15 = arith.constant 0 : index
      %17 = vector.load %arg5[%c0_14, %c0_15] : memref<1x128xf32, #tpu.memory_space<vmem>>, vector<1x128xf32>
      %18 = vector.broadcast %17 : vector<1x128xf32> to vector<16x128xf32>
      %19 = arith.addf %16, %18 : vector<16x128xf32>
      %20 = vector.broadcast %15 : vector<1x128xf32> to vector<16x128xf32>
      %21 = arith.mulf %19, %20 : vector<16x128xf32>
      %c0_16 = arith.constant 0 : index
      %c0_17 = arith.constant 0 : index
      %22 = vector.load %arg7[%c0_16, %c0_17] : memref<16x128xf32, #tpu.memory_space<vmem>>, vector<16x128xf32>
      tpu.vector_store %arg7[%c0_16, %c0_17], %21 {strides = array<i32>} : memref<16x128xf32, #tpu.memory_space<vmem>>, vector<16x128xf32>,
    } else {
    }
    return
  }
  func.func @transform_0(%arg0: i32, %arg1: i32, %arg2: i32) -> (i32, i32) {
    %c0_i32 = arith.constant 0 : i32
    return %arg0, %arg2 : i32, i32
  }
  func.func @transform_1(%arg0: i32, %arg1: i32, %arg2: i32) -> (i32, i32) {
    %c0_i32 = arith.constant 0 : i32
    return %arg2, %arg1 : i32, i32
  }
  func.func @transform_2(%arg0: i32, %arg1: i32, %arg2: i32) -> (i32, i32) {
    %c0_i32 = arith.constant 0 : i32
    %c0_i32_0 = arith.constant 0 : i32
    return %c0_i32, %arg1 : i32, i32
  }
  func.func @transform_3(%arg0: i32, %arg1: i32, %arg2: i32) -> (i32, i32) {
    %c0_i32 = arith.constant 0 : i32
    %c0_i32_0 = arith.constant 0 : i32
    return %c0_i32, %arg1 : i32, i32
  }
  func.func @transform_4(%arg0: i32, %arg1: i32, %arg2: i32) -> (i32, i32) {
    %c0_i32 = arith.constant 0 : i32
    return %arg0, %arg1 : i32, i32
  }
}

</mosaic_0001>

<llo_original>
// kernel: tpu_custom_call.1
$region0: #{tpu_custom_call.1}
  #allocation0 [shape = 'u32[]', space=smem, size = 0x4, offset = 0x4, fixed_abs, tag = 'smem constant byte address 0x4 - core index']
  #allocation1 [shape = 'u32[144,128]{1,0:T(1,128)}', space=vmem, size = 0x12000, scoped, tag = 'internal scratch']
  #allocation2 [shape = 'f32[16,128]{1,0:T(8,128)}', space=vmem, size = 0x2000, scoped, tag = 'scratch operand']
  %s0 = inlined_call_operand.hbm [shape: bf16[32,256], index: 0, kind: input, shape index: {}]
  %s1 = inlined_call_operand.hbm [shape: bf16[256,128], index: 1, kind: input, shape index: {}]
  %s2 = inlined_call_operand.vmem [shape: f32[1,128], index: 2, kind: input, shape index: {}]
  %s3 = inlined_call_operand.vmem [shape: f32[1,128], index: 3, kind: input, shape index: {}]
  %s4 = inlined_call_operand.hbm [shape: f32[32,128], index: 4, kind: output, shape index: {}]
  %s5 = sld [smem:[#allocation0]]
  $region65: #{tpu_custom_call.1} parent=0
    _
  %s7 = ssub.s32 1, %s5
  %s8 = scalar_select 0, %s7, %s5
  $region1: #{tpu_custom_call.1} parent=0
    #allocation3 [shape = 'u8[8192]{0}', space=vmem, size = 0x2000, scoped, tag = 'input window, operand 0']
    #allocation4 [shape = 's32[2]{0}', space=sflag, size = 0x8, scoped, tag = 'scoped memory for tpu_custom_call.1']
    #allocation5 [shape = 's32[2]{0}', space=sflag, size = 0x8, scoped, tag = 'scoped memory for tpu_custom_call.1']
    #allocation6 [shape = 'u8[65536]{0}', space=vmem, size = 0x10000, scoped, tag = 'input window, operand 1']
    #allocation7 [shape = 's32[2]{0}', space=sflag, size = 0x8, scoped, tag = 'scoped memory for tpu_custom_call.1']
    #allocation8 [shape = 'u8[16384]{0}', space=vmem, size = 0x4000, scoped, tag = 'output window, operand 0']
    %9 = vsyncpa [#allocation4], 0
    %s10 = scalar_lea.sflag [#allocation4], 1
    %11 = vsyncpa %s10, 0
    %12 = vsyncpa [#allocation7], 0
    %s13 = scalar_lea.sflag [#allocation7], 1
    %14 = vsyncpa %s13, 0
    %15 = vsyncpa [#allocation5], 0
    %s16 = scalar_lea.sflag [#allocation5], 1
    %17 = vsyncpa %s16, 0
    loop: start=0, step=1, limit=6
    $region2: #{tpu_custom_call.1} parent=1 // loop_pre_header
      _
    $region3: #{tpu_custom_call.1} parent=1 // loop_header
      %s19 = sphi 0, %s23
      %p20 = scmp.ge.s32.totalorder %s19, 6
      %s26 = sphi 0, %s45
      %s27 = sphi 0, %s41
      %s28 = sphi 0, %s37
      %s29 = sphi 0, %s26
      %s30 = sphi 0, %s27
      %s31 = sphi 0, %s28
      %s32 = sphi 0, %s29
      %s33 = sphi 0, %s30
      %s34 = sphi 0, %s31
      %s50 = sphi 0, %s52
      %s53 = sphi 0, %s50
      %s54 = sphi 0, %s53
      %s70 = sphi 0, %s54
      %s78 = sphi 0, %s80
      %s81 = sphi 0, %s78
      %s82 = sphi 0, %s81
      %s98 = sphi 0, %s82
      %s104 = sphi 0, %s106
      %s107 = sphi 0, %s104
      %s108 = sphi 0, %s107
      %s124 = sphi 0, %s108
      %s130 = sphi 0, %s132
      %s133 = sphi 0, %s130
      %s134 = sphi 0, %s133
      %s150 = sphi 0, %s134
      %s158 = sphi 0, %s160
      %s161 = sphi 0, %s158
      %s162 = sphi 0, %s161
      %s178 = sphi 0, %s162
    $region4: #{tpu_custom_call.1} parent=1 // loop_header_branch
      %22 = sbr.rel (%p20) target = $region8
    $region5: #{tpu_custom_call.1} parent=1 // loop_body
      %s24 = ssub.s32 %s19, 1
      %s25 = ssub.s32 %s19, 2
      %s35 = sadd.s32 1, %s28
      %p36 = scmp.ge.s32.totalorder %s35, 2
      %s37 = scalar_select %p36, 0, %s35
      %s38 = sadd.s32 1, %s27
      %s39 = scalar_select %p36, %s38, %s27
      %p40 = scmp.ge.s32.totalorder %s39, 1
      %s41 = scalar_select %p40, 0, %s39
      %s42 = sadd.s32 1, %s26
      %s43 = scalar_select %p40, %s42, %s26
      %p44 = scmp.ge.s32.totalorder %s43, 2
      %s45 = scalar_select %p44, 0, %s43
      %s46 = ssub.s32 %s26, %s45
      %s47 = ssub.s32 %s28, %s37
      %s48 = sor.u32 %s46, %s47
      %p49 = scmp.eq.s32.totalorder %s48, 0
      %s51 = sadd.s32 %s50, 1
      %s52 = scalar_select %p49, %s50, %s51
      %p55 = pneg %p49
      %p56 = scmp.eq.s32.totalorder %s19, 3
      %p57 = por %p55, %p56
      %p58 = scmp.ne.s32.totalorder %s50, %s53
      %p59 = scmp.eq.s32.totalorder %s19, 0
      %p60 = por %p58, %p59
      %p61 = scmp.ne.s32.totalorder %s50, %s53
      %p62 = scmp.eq.s32.totalorder %s24, 3
      %p63 = por %p61, %p62
      %p64 = scmp.ne.s32.totalorder %s53, %s54
      %p65 = scmp.eq.s32.totalorder %s24, 0
      %p66 = por %p64, %p65
      %p67 = scmp.ne.s32.totalorder %s53, %s54
      %p68 = scmp.eq.s32.totalorder %s25, 3
      %p69 = por %p67, %p68
      %p71 = scmp.ne.s32.totalorder %s54, %s70
      %p72 = scmp.eq.s32.totalorder %s25, 0
      %p73 = por %p71, %p72
      %s74 = ssub.s32 %s28, %s37
      %s75 = ssub.s32 %s27, %s41
      %s76 = sor.u32 %s74, %s75
      %p77 = scmp.eq.s32.totalorder %s76, 0
      %s79 = sadd.s32 %s78, 1
      %s80 = scalar_select %p77, %s78, %s79
      %p83 = pneg %p77
      %p84 = scmp.eq.s32.totalorder %s19, 3
      %p85 = por %p83, %p84
      %p86 = scmp.ne.s32.totalorder %s78, %s81
      %p87 = scmp.eq.s32.totalorder %s19, 0
      %p88 = por %p86, %p87
      %p89 = scmp.ne.s32.totalorder %s78, %s81
      %p90 = scmp.eq.s32.totalorder %s24, 3
      %p91 = por %p89, %p90
      %p92 = scmp.ne.s32.totalorder %s81, %s82
      %p93 = scmp.eq.s32.totalorder %s24, 0
      %p94 = por %p92, %p93
      %p95 = scmp.ne.s32.totalorder %s81, %s82
      %p96 = scmp.eq.s32.totalorder %s25, 3
      %p97 = por %p95, %p96
      %p99 = scmp.ne.s32.totalorder %s82, %s98
      %p100 = scmp.eq.s32.totalorder %s25, 0
      %p101 = por %p99, %p100
      %s102 = ssub.s32 %s27, %s41
      %p103 = scmp.eq.s32.totalorder %s102, 0
      %s105 = sadd.s32 %s104, 1
      %s106 = scalar_select %p103, %s104, %s105
      %p109 = pneg %p103
      %p110 = scmp.eq.s32.totalorder %s19, 3
      %p111 = por %p109, %p110
      %p112 = scmp.ne.s32.totalorder %s104, %s107
      %p113 = scmp.eq.s32.totalorder %s19, 0
      %p114 = por %p112, %p113
      %p115 = scmp.ne.s32.totalorder %s104, %s107
      %p116 = scmp.eq.s32.totalorder %s24, 3
      %p117 = por %p115, %p116
      %p118 = scmp.ne.s32.totalorder %s107, %s108
      %p119 = scmp.eq.s32.totalorder %s24, 0
      %p120 = por %p118, %p119
      %p121 = scmp.ne.s32.totalorder %s107, %s108
      %p122 = scmp.eq.s32.totalorder %s25, 3
      %p123 = por %p121, %p122
      %p125 = scmp.ne.s32.totalorder %s108, %s124
      %p126 = scmp.eq.s32.totalorder %s25, 0
      %p127 = por %p125, %p126
      %s128 = ssub.s32 %s27, %s41
      %p129 = scmp.eq.s32.totalorder %s128, 0
      %s131 = sadd.s32 %s130, 1
      %s132 = scalar_select %p129, %s130, %s131
      %p135 = pneg %p129
      %p136 = scmp.eq.s32.totalorder %s19, 3
      %p137 = por %p135, %p136
      %p138 = scmp.ne.s32.totalorder %s130, %s133
      %p139 = scmp.eq.s32.totalorder %s19, 0
      %p140 = por %p138, %p139
      %p141 = scmp.ne.s32.totalorder %s130, %s133
      %p142 = scmp.eq.s32.totalorder %s24, 3
      %p143 = por %p141, %p142
      %p144 = scmp.ne.s32.totalorder %s133, %s134
      %p145 = scmp.eq.s32.totalorder %s24, 0
      %p146 = por %p144, %p145
      %p147 = scmp.ne.s32.totalorder %s133, %s134
      %p148 = scmp.eq.s32.totalorder %s25, 3
      %p149 = por %p147, %p148
      %p151 = scmp.ne.s32.totalorder %s134, %s150
      %p152 = scmp.eq.s32.totalorder %s25, 0
      %p153 = por %p151, %p152
      %s154 = ssub.s32 %s26, %s45
      %s155 = ssub.s32 %s27, %s41
      %s156 = sor.u32 %s154, %s155
      %p157 = scmp.eq.s32.totalorder %s156, 0
      %s159 = sadd.s32 %s158, 1
      %s160 = scalar_select %p157, %s158, %s159
      %p163 = pneg %p157
      %p164 = scmp.eq.s32.totalorder %s19, 3
      %p165 = por %p163, %p164
      %p166 = scmp.ne.s32.totalorder %s158, %s161
      %p167 = scmp.eq.s32.totalorder %s19, 0
      %p168 = por %p166, %p167
      %p169 = scmp.ne.s32.totalorder %s158, %s161
      %p170 = scmp.eq.s32.totalorder %s24, 3
      %p171 = por %p169, %p170
      %p172 = scmp.ne.s32.totalorder %s161, %s162
      %p173 = scmp.eq.s32.totalorder %s24, 0
      %p174 = por %p172, %p173
      %p175 = scmp.ne.s32.totalorder %s161, %s162
      %p176 = scmp.eq.s32.totalorder %s25, 3
      %p177 = por %p175, %p176
      %p179 = scmp.ne.s32.totalorder %s162, %s178
      %p180 = scmp.eq.s32.totalorder %s25, 0
      %p181 = por %p179, %p180
      %p182 = scmp.le.s32.totalorder 1, %s19
      %p183 = scmp.lt.s32.totalorder %s19, 5
      %p184 = pnand %p182, %p183
      %p185 = pneg %p184
      // Predicated region
      $region9: #{tpu_custom_call.1} parent=5 // pred_check
        _
      $region10: #{tpu_custom_call.1} parent=5 // pred_check_branch
        %187 = sbr.rel (%p184) target = $region12
      $region11: #{tpu_custom_call.1} parent=5 // pred_region
        %s188 = ssub.s32 %s19, 1
        // Predicated region
        $region13: #{tpu_custom_call.1} parent=11 // pred_check
          %p189 = pneg %p120
        $region14: #{tpu_custom_call.1} parent=11 // pred_check_branch
          %191 = sbr.rel (%p189) target = $region16
        $region15: #{tpu_custom_call.1} parent=11 // pred_region
          %p192 = scmp.lt.s32.totalorder %s30, 0
          %s193 = scalar_select %p192, %s30, 0
          %s194 = scalar_lea.vmem %s2, %s193
        $region16: #{tpu_custom_call.1} parent=11 // pred_fallthru
          _
        // Predicated region
        $region17: #{tpu_custom_call.1} parent=11 // pred_check
          %p195 = pneg %p146
        $region18: #{tpu_custom_call.1} parent=11 // pred_check_branch
          %197 = sbr.rel (%p195) target = $region20
        $region19: #{tpu_custom_call.1} parent=11 // pred_region
          %p198 = scmp.lt.s32.totalorder %s30, 0
          %s199 = scalar_select %p198, %s30, 0
          %s200 = scalar_lea.vmem %s3, %s199
        $region20: #{tpu_custom_call.1} parent=11 // pred_fallthru
          _
      $region12: #{tpu_custom_call.1} parent=5 // pred_fallthru
        _
      %p201 = scmp.lt.s32.totalorder %s19, 4
      // Predicated region
      $region21: #{tpu_custom_call.1} parent=5 // pred_check
        %p202 = pneg %p201
      $region22: #{tpu_custom_call.1} parent=5 // pred_check_branch
        %204 = sbr.rel (%p202) target = $region24
      $region23: #{tpu_custom_call.1} parent=5 // pred_region
        // Predicated region
        $region25: #{tpu_custom_call.1} parent=23 // pred_check
          %p205 = pneg %p60
        $region26: #{tpu_custom_call.1} parent=23 // pred_check_branch
          %207 = sbr.rel (%p205) target = $region28
        $region27: #{tpu_custom_call.1} parent=23 // pred_region
          %s208 = sand.u32 %s50, 1
          %s209 = scalar_lea.sflag [#allocation4], %s208
          %s210 = sand.u32 %s50, 1
          %s211 = smul.addr %s210, 8
          %s212 = scalar_lea.vmem [#allocation3], %s211
          %s213 = smul.u32 2, %s26
          %s215 = ssub.s32 128, 128
          %216 = vsyncadd %s209, %s215
          %s217 = smul.addr %s213, 2
          %s218 = sadd.s32 %s28, %s217
          %s219 = smul.addr %s218, 64
          %s220 = scalar_lea.hbm %s0, %s219
          %s221 = sshll.u32 %s212, 4
          %s222 = int_to_ptr.vmem [resolvable:$true] %s221
          %227 = dma.hbm_to_vmem [thread:$0]  %s220, 128, %s222, %s209, 128, 64, 4
        $region28: #{tpu_custom_call.1} parent=23 // pred_fallthru
          _
        // Predicated region
        $region29: #{tpu_custom_call.1} parent=23 // pred_check
          %p228 = pneg %p88
        $region30: #{tpu_custom_call.1} parent=23 // pred_check_branch
          %230 = sbr.rel (%p228) target = $region32
        $region31: #{tpu_custom_call.1} parent=23 // pred_region
          %s231 = sand.u32 %s78, 1
          %s232 = scalar_lea.sflag [#allocation7], %s231
          %s233 = sand.u32 %s78, 1
          %s234 = smul.addr %s233, 64
          %s235 = scalar_lea.vmem [#allocation6], %s234
          %s236 = smul.u32 16, %s28
          %s238 = ssub.s32 1024, 1024
          %239 = vsyncadd %s232, %s238
          %s240 = sadd.s32 %s27, %s236
          %s241 = smul.addr %s240, 64
          %s242 = scalar_lea.hbm %s1, %s241
          %s243 = sshll.u32 %s235, 4
          %s244 = int_to_ptr.vmem [resolvable:$true] %s243
          %249 = dma.hbm_to_vmem [thread:$0]  %s242, 1024, %s244, %s232, 64, 64, 4
        $region32: #{tpu_custom_call.1} parent=23 // pred_fallthru
          _
      $region24: #{tpu_custom_call.1} parent=5 // pred_fallthru
        _
      %p250 = scmp.le.s32.totalorder 1, %s19
      %p251 = scmp.lt.s32.totalorder %s19, 5
      %p252 = pnand %p250, %p251
      %p253 = pneg %p252
      // Predicated region
      $region33: #{tpu_custom_call.1} parent=5 // pred_check
        _
      $region34: #{tpu_custom_call.1} parent=5 // pred_check_branch
        %255 = sbr.rel (%p252) target = $region36
      $region35: #{tpu_custom_call.1} parent=5 // pred_region
        %s256 = ssub.s32 %s19, 1
        %s257 = sand.u32 %s53, 1
        %s258 = scalar_lea.sflag [#allocation4], %s257
        %s259 = sand.u32 %s53, 1
        %s260 = smul.addr %s259, 8
        %s261 = scalar_lea.vmem [#allocation3], %s260
        // Predicated region
        $region37: #{tpu_custom_call.1} parent=35 // pred_check
          %p262 = pneg %p66
        $region38: #{tpu_custom_call.1} parent=35 // pred_check_branch
          %264 = sbr.rel (%p262) target = $region40
        $region39: #{tpu_custom_call.1} parent=35 // pred_region
          %265 = dma.done %s258, 128
        $region40: #{tpu_custom_call.1} parent=35 // pred_fallthru
          _
        %s266 = sand.u32 %s81, 1
        %s267 = scalar_lea.sflag [#allocation7], %s266
        %s268 = sand.u32 %s81, 1
        %s269 = smul.addr %s268, 64
        %s270 = scalar_lea.vmem [#allocation6], %s269
        // Predicated region
        $region41: #{tpu_custom_call.1} parent=35 // pred_check
          %p271 = pneg %p94
        $region42: #{tpu_custom_call.1} parent=35 // pred_check_branch
          %273 = sbr.rel (%p271) target = $region44
        $region43: #{tpu_custom_call.1} parent=35 // pred_region
          %274 = dma.done %s267, 1024
        $region44: #{tpu_custom_call.1} parent=35 // pred_fallthru
          _
        %s275 = sand.u32 %s53, 1
        %s276 = scalar_lea.sflag [#allocation4], %s275
        %s277 = sand.u32 %s53, 1
        %s278 = smul.addr %s277, 8
        %s279 = scalar_lea.vmem [#allocation3], %s278
        %p280 = pneg %p66
        %p281 = pneg %p63
        %s282 = sand.u32 %s81, 1
        %s283 = scalar_lea.sflag [#allocation7], %s282
        %s284 = sand.u32 %s81, 1
        %s285 = smul.addr %s284, 64
        %s286 = scalar_lea.vmem [#allocation6], %s285
        %p287 = pneg %p94
        %p288 = pneg %p91
        %p289 = scmp.lt.s32.totalorder %s30, 0
        %s290 = scalar_select %p289, %s30, 0
        %s291 = scalar_lea.vmem %s2, %s290
        %p292 = pneg %p120
        %p293 = pneg %p117
        %p294 = scmp.lt.s32.totalorder %s30, 0
        %s295 = scalar_select %p294, %s30, 0
        %s296 = scalar_lea.vmem %s3, %s295
        %p297 = pneg %p146
        %p298 = pneg %p143
        %p299 = pneg %p174
        %p300 = pneg %p171
        %s301 = sand.u32 %s161, 1
        %s302 = scalar_lea.sflag [#allocation5], %s301
        %s303 = sand.u32 %s161, 1
        %s304 = smul.addr %s303, 16
        %s305 = scalar_lea.vmem [#allocation8], %s304
        %s306 = smul.u32 2, %s29
        %s307 = smul.u32 16, %s31
        %p308 = scmp.lt.s32.totalorder %s30, 0
        %s309 = scalar_select %p308, %s30, 0
        %s310 = scalar_lea.vmem %s2, %s309
        %p311 = scmp.lt.s32.totalorder %s30, 0
        %s312 = scalar_select %p311, %s30, 0
        %s313 = scalar_lea.vmem %s3, %s312
        %s314 = smul.u32 2, %s29
        %p316 = scmp.eq.s32.totalorder %s31, 0
        // Predicated region
        $region45: #{tpu_custom_call.1} parent=35 // pred_check
          %p317 = pneg %p316
        $region46: #{tpu_custom_call.1} parent=35 // pred_check_branch
          %319 = sbr.rel (%p317) target = $region48
        $region47: #{tpu_custom_call.1} parent=35 // pred_region
          %320 = vst [vmem:[#allocation2] sm:$0xff] 0.0
          %321 = vst [vmem:[#allocation2 + $0x8] sm:$0xff] 0.0
        $region48: #{tpu_custom_call.1} parent=35 // pred_fallthru
          _
        %v322 = vld [vmem:[#allocation2] sm:$0xff]
        %v323 = vld [vmem:[#allocation2 + $0x8] sm:$0xff]
        %v324 = vld [vmem:[%s261] sm:$0xf]
        %v325 = vld [vmem:[%s261 + $0x4] sm:$0xf]
        %v326 = vld [vmem:[%s270] sm:$0xf]
        %v327 = vld [vmem:[%s270 + $0x4] sm:$0xf]
        %v328 = vld [vmem:[%s270 + $0x8] sm:$0xf]
        %v329 = vld [vmem:[%s270 + $0xc] sm:$0xf]
        %v330 = vld [vmem:[%s270 + $0x10] sm:$0xf]
        %v331 = vld [vmem:[%s270 + $0x14] sm:$0xf]
        %v332 = vld [vmem:[%s270 + $0x18] sm:$0xf]
        %v333 = vld [vmem:[%s270 + $0x1c] sm:$0xf]
        %v334 = vld [vmem:[%s270 + $0x20] sm:$0xf]
        %v335 = vld [vmem:[%s270 + $0x24] sm:$0xf]
        %v336 = vld [vmem:[%s270 + $0x28] sm:$0xf]
        %v337 = vld [vmem:[%s270 + $0x2c] sm:$0xf]
        %v338 = vld [vmem:[%s270 + $0x30] sm:$0xf]
        %v339 = vld [vmem:[%s270 + $0x34] sm:$0xf]
        %v340 = vld [vmem:[%s270 + $0x38] sm:$0xf]
        %v341 = vld [vmem:[%s270 + $0x3c] sm:$0xf]
        %v344 = vunpack.c.l.b16 %v324
        %v345 = vunpack.c.l.b16 %v325
        %v346 = vpack.c.b16 %v345, %v344
        %v364 = vunpack.c.l.b16 %v326
        %v365 = vunpack.c.l.b16 %v327
        %v366 = vunpack.c.l.b16 %v328
        %v367 = vunpack.c.l.b16 %v329
        %v368 = vunpack.c.l.b16 %v330
        %v369 = vunpack.c.l.b16 %v331
        %v370 = vunpack.c.l.b16 %v332
        %v371 = vunpack.c.l.b16 %v333
        %v372 = vunpack.c.l.b16 %v334
        %v373 = vunpack.c.l.b16 %v335
        %v374 = vunpack.c.l.b16 %v336
        %v375 = vunpack.c.l.b16 %v337
        %v376 = vunpack.c.l.b16 %v338
        %v377 = vunpack.c.l.b16 %v339
        %v378 = vunpack.c.l.b16 %v340
        %v379 = vunpack.c.l.b16 %v341
        %v380 = vpack.c.b16 %v365, %v364
        %v381 = vpack.c.b16 %v367, %v366
        %v382 = vpack.c.b16 %v369, %v368
        %v383 = vpack.c.b16 %v371, %v370
        %v384 = vpack.c.b16 %v373, %v372
        %v385 = vpack.c.b16 %v375, %v374
        %v386 = vpack.c.b16 %v377, %v376
        %v387 = vpack.c.b16 %v379, %v378
        %396 = vmatprep.subr.bf16.mxu0 0
        %397 = vmatpush1.bf16.msra.mxu0 %v387
        %398 = vmatprep.subr.bf16.mxu0 0
        %399 = vmatpush1.bf16.msra.mxu0 %v386
        %400 = vmatprep.subr.bf16.mxu0 0
        %401 = vmatpush1.bf16.msra.mxu0 %v385
        %402 = vmatprep.subr.bf16.mxu0 0
        %403 = vmatpush1.bf16.msra.mxu0 %v384
        %404 = vmatprep.subr.bf16.mxu0 0
        %405 = vmatpush1.bf16.msra.mxu0 %v383
        %406 = vmatprep.subr.bf16.mxu0 0
        %407 = vmatpush1.bf16.msra.mxu0 %v382
        %408 = vmatprep.subr.bf16.mxu0 0
        %409 = vmatpush1.bf16.msra.mxu0 %v381
        %410 = vmatprep.subr.bf16.mxu0 0
        %411 = vmatpush1.bf16.msra.mxu0 %v380
        %412 = vmatprep.subr.bf16.mxu0 0
        %413 = vmatpush2.bf16.msra.mxu0 0
        %414 = vmatprep.subr.bf16.mxu0 0
        %415 = vmatpush2.bf16.msra.mxu0 0
        %416 = vmatprep.subr.bf16.mxu0 0
        %417 = vmatpush2.bf16.msra.mxu0 0
        %418 = vmatprep.subr.bf16.mxu0 0
        %419 = vmatpush2.bf16.msra.mxu0 0
        %420 = vmatprep.subr.bf16.mxu0 0
        %421 = vmatpush2.bf16.msra.mxu0 0
        %422 = vmatprep.subr.bf16.mxu0 0
        %423 = vmatpush2.bf16.msra.mxu0 0
        %424 = vmatprep.subr.bf16.mxu0 0
        %425 = vmatpush2.bf16.msra.mxu0 0
        %426 = vmatprep.subr.bf16.mxu0 0
        %427 = vmatpush2.bf16.msra.mxu0 0
        %428 = vmatprep.mubr.bf16.mxu0 0
        %429 = vmatmul.mubr.bf16.gmra.mxu0 %v346
        %v430 = vpop.f32.mrf.mxu0
        %v431 = vadd.f32 0.0, %v430
        %v432 = vpop.f32.mrf.mxu0
        %v433 = vpop.f32.mrf.mxu0
        %v434 = vadd.f32 0.0, %v433
        %v435 = vpop.f32.mrf.mxu0
        %436 = vdwg.mxu0
        %v437 = vadd.f32 %v322, %v431
        %v438 = vadd.f32 %v323, %v434
        %439 = vst [vmem:[#allocation2] sm:$0xff] %v437
        %440 = vst [vmem:[#allocation2 + $0x8] sm:$0xff] %v438
        %p441 = scmp.eq.s32.totalorder %s31, 1
        // Predicated region
        $region49: #{tpu_custom_call.1} parent=35 // pred_check
          %p442 = pneg %p441
        $region50: #{tpu_custom_call.1} parent=35 // pred_check_branch
          %444 = sbr.rel (%p442) target = $region52
        $region51: #{tpu_custom_call.1} parent=35 // pred_region
          %v445 = vld [vmem:[%s313] sm:$0x1]
          %v446 = vmul.f32 %v445, 3.0
          %v447 = vmul.f32 %v446, 1.442695
          %v448 = vpow.pop %v447
          %v449 = vld [vmem:[#allocation2] sm:$0xff]
          %v450 = vld [vmem:[#allocation2 + $0x8] sm:$0xff]
          %v451 = vld [vmem:[%s310] sm:$0x1]
          %v453 = vlaneseq
          %v454 = vshrl.u32 %v453, 7
          %v455 = vsub.s32 0, %v454
          %v456 = vrot.slane %v451, %v455
          %v458 = vadd.f32 %v449, %v456
          %v459 = vadd.f32 %v450, %v456
          %v461 = vlaneseq
          %v462 = vshrl.u32 %v461, 7
          %v463 = vsub.s32 0, %v462
          %v464 = vrot.slane %v448, %v463
          %v466 = vmul.f32 %v458, %v464
          %v467 = vmul.f32 %v459, %v464
          %468 = vst [vmem:[%s305] sm:$0xff] %v466
          %469 = vst [vmem:[%s305 + $0x8] sm:$0xff] %v467
        $region52: #{tpu_custom_call.1} parent=35 // pred_fallthru
          _
        %s470 = sand.u32 %s161, 1
        %s471 = scalar_lea.sflag [#allocation5], %s470
        %s472 = sand.u32 %s161, 1
        %s473 = smul.addr %s472, 16
        %s474 = scalar_lea.vmem [#allocation8], %s473
        // Predicated region
        $region53: #{tpu_custom_call.1} parent=35 // pred_check
          %p475 = pneg %p171
        $region54: #{tpu_custom_call.1} parent=35 // pred_check_branch
          %477 = sbr.rel (%p475) target = $region56
        $region55: #{tpu_custom_call.1} parent=35 // pred_region
          %s478 = smul.u32 2, %s29
          %s480 = ssub.s32 256, 256
          %481 = vsyncadd %s471, %s480
          %s482 = sadd.s32 %s30, %s478
          %s483 = smul.addr %s482, 128
          %s484 = scalar_lea.hbm %s4, %s483
          %s485 = sshll.u32 %s474, 4
          %s486 = int_to_ptr.vmem [resolvable:$true] %s485
          %491 = dma.vmem_to_hbm [thread:$0]  %s486, 256, %s484, %s471, 128, 128, 8
        $region56: #{tpu_custom_call.1} parent=35 // pred_fallthru
          _
      $region36: #{tpu_custom_call.1} parent=5 // pred_fallthru
        _
      %p492 = scmp.le.s32.totalorder 2, %s19
      // Predicated region
      $region57: #{tpu_custom_call.1} parent=5 // pred_check
        %p493 = pneg %p492
      $region58: #{tpu_custom_call.1} parent=5 // pred_check_branch
        %495 = sbr.rel (%p493) target = $region60
      $region59: #{tpu_custom_call.1} parent=5 // pred_region
        %s496 = ssub.s32 %s19, 2
        // Predicated region
        $region61: #{tpu_custom_call.1} parent=59 // pred_check
          %p497 = pneg %p177
        $region62: #{tpu_custom_call.1} parent=59 // pred_check_branch
          %499 = sbr.rel (%p497) target = $region64
        $region63: #{tpu_custom_call.1} parent=59 // pred_region
          %s500 = sand.u32 %s162, 1
          %s501 = scalar_lea.sflag [#allocation5], %s500
          %s502 = sand.u32 %s162, 1
          %s503 = smul.addr %s502, 16
          %s504 = scalar_lea.vmem [#allocation8], %s503
          %505 = dma.done %s501, 256
        $region64: #{tpu_custom_call.1} parent=59 // pred_fallthru
          _
      $region60: #{tpu_custom_call.1} parent=5 // pred_fallthru
        _
    $region6: #{tpu_custom_call.1} parent=1 // loop_footer
      %s23 = sadd.s32 1, %s19
    $region7: #{tpu_custom_call.1} parent=1 // loop_footer_branch
      %18 = sbr.rel target = $region3
    $region8: #{tpu_custom_call.1} parent=1 // loop_exit
      _
    %506 = vsyncpa [#allocation4], 1
    %s507 = scalar_lea.sflag [#allocation4], 1
    %508 = vsyncpa %s507, 1
    %509 = vsyncpa [#allocation7], 1
    %s510 = scalar_lea.sflag [#allocation7], 1
    %511 = vsyncpa %s510, 1
    %512 = vsyncpa [#allocation5], 1
    %s513 = scalar_lea.sflag [#allocation5], 1
    %514 = vsyncpa %s513, 1

</llo_original>
